<compile_context>
chip_gen: v6e
topology: v6e:2x2x1
jax: 0.10.0
libtpu: 0.0.40
codegen_flags: <defaults>
</compile_context>

<pallas_src>
import functools

import jax
import jax.numpy as jnp
from jax.experimental import pallas as pl
from jax.experimental.pallas import tpu as pltpu

_LANE = 128
_SUBLANE = 8


def _round_up(x, m):
    return (x + m - 1) // m * m


def _dice_kernel(x_ref, t_ref, out_ref, inter_acc, psum_acc, *, smooth):
    sj = pl.program_id(1)

    # Reset the per-channel accumulators at the start of each spatial sweep.
    @pl.when(sj == 0)
    def _():
        inter_acc[...] = jnp.zeros_like(inter_acc)
        psum_acc[...] = jnp.zeros_like(psum_acc)

    # (CH_BLOCK, SP_BLOCK) tiles; compute in f32 regardless of input dtype.
    x = x_ref[...].astype(jnp.float32)
    t = t_ref[...].astype(jnp.float32)
    p = jax.nn.sigmoid(x)

    # Per-channel partial reductions over the spatial (lane) axis.
    inter_acc[...] += jnp.sum(p * t, axis=-1, keepdims=True)
    psum_acc[...] += jnp.sum(p + t, axis=-1, keepdims=True)

    # Finalize per-channel dice loss on the last spatial step; broadcast the
    # (CH_BLOCK, 1) losses across 128 lanes for an unmasked lane-dense store.
    @pl.when(sj == pl.num_programs(1) - 1)
    def _():
        loss = 1.0 - (2.0 * inter_acc[...] + smooth) / (psum_acc[...] + smooth)
        out_ref[...] = jnp.broadcast_to(loss, out_ref.shape)


def dice_loss(logits, target, smooth=1.0):
    """Pallas implementation of DiceLoss.forward.

    logits, target: (B, C, H, W) arrays.  Returns a scalar float32.
    """
    assert logits.shape == target.shape
    B, C, H, W = logits.shape
    N = B * C
    S = H * W

    # Lane-dense (channels, spatial) layout.  Keep floating inputs in their
    # original dtype (bf16 halves HBM traffic); upcast to f32 inside the kernel.
    x = logits.reshape(N, S)
    t = target.reshape(N, S)
    if not jnp.issubdtype(x.dtype, jnp.floating):
        x = x.astype(jnp.float32)
    if not jnp.issubdtype(t.dtype, jnp.floating):
        t = t.astype(jnp.float32)

    # Adaptive block sizing: target ~4 MiB of f32 per input block
    # (2 inputs x 2 pipeline buffers ~= 16 MiB, comfortably under scoped
    # VMEM on all generations).  Spend the budget on the spatial (lane) axis
    # first, then fuse channels (sublanes) with the remainder; cap the
    # channel block to bound padding waste and keep the channel grid axis
    # large enough to shard across cores.
    target_elems = 1024 * 1024
    sp_cap = max(_LANE, (target_elems // _SUBLANE) // _LANE * _LANE)
    sp_block = min(_round_up(S, _LANE), sp_cap)
    ch_cap = max(_SUBLANE, (target_elems // sp_block) // _SUBLANE * _SUBLANE)
    ch_block = min(_round_up(N, _SUBLANE), ch_cap, 256)

    n_pad = _round_up(N, ch_block)
    s_pad = _round_up(S, sp_block)

    if (n_pad, s_pad) != (N, S):
        # Pad logits with a large negative value (sigmoid -> 0) and targets
        # with 0 so padded elements contribute nothing to any reduction.
        x = jnp.pad(x, ((0, n_pad - N), (0, s_pad - S)), constant_values=-1e9)
        t = jnp.pad(t, ((0, n_pad - N), (0, s_pad - S)), constant_values=0)

    grid = (n_pad // ch_block, s_pad // sp_block)

    kernel = functools.partial(_dice_kernel, smooth=float(smooth))

    out = pl.pallas_call(
        kernel,
        out_shape=jax.ShapeDtypeStruct((n_pad, _LANE), jnp.float32),
        grid_spec=pltpu.PrefetchScalarGridSpec(
            num_scalar_prefetch=0,
            grid=grid,
            in_specs=[
                pl.BlockSpec((ch_block, sp_block), lambda ci, sj: (ci, sj)),
                pl.BlockSpec((ch_block, sp_block), lambda ci, sj: (ci, sj)),
            ],
            out_specs=pl.BlockSpec((ch_block, _LANE), lambda ci, sj: (ci, 0)),
            scratch_shapes=[
                pltpu.VMEM((ch_block, 1), jnp.float32),  # sum(p * t)
                pltpu.VMEM((ch_block, 1), jnp.float32),  # sum(p) + sum(t)
            ],
        ),
        compiler_params=pltpu.CompilerParams(
            dimension_semantics=("parallel", "arbitrary"),
            vmem_limit_bytes=32 * 1024 * 1024,
        ),
    )(x, t)

    # Final mean over the real B*C channels (padded rows are discarded).
    per_channel = out[:N, 0]
    return jnp.mean(per_channel)


def dice_loss_ref(logits, target, smooth=1.0):
    """Pure-JAX reference mirroring the PyTorch module."""
    p = jax.nn.sigmoid(logits.astype(jnp.float32))
    t = target.astype(jnp.float32)
    inter = jnp.sum(p * t, axis=(2, 3))
    sp = jnp.sum(p, axis=(2, 3))
    st = jnp.sum(t, axis=(2, 3))
    per_ch = 1.0 - (2.0 * inter + smooth) / (sp + st + smooth)
    return jnp.mean(per_ch)


if __name__ == "__main__":
    key = jax.random.PRNGKey(0)
    k1, k2 = jax.random.split(key)

    B, C, H, W = 2, 4, 16, 16
    logits = jax.random.normal(k1, (B, C, H, W), dtype=jnp.float32)
    # Binary-ish targets, like segmentation masks.
    target = (jax.random.uniform(k2, (B, C, H, W)) > 0.5).astype(jnp.float32)

    out = dice_loss(logits, target, smooth=1.0)
    out = jax.block_until_ready(out)

    ref = dice_loss_ref(logits, target, smooth=1.0)
    assert jnp.allclose(out, ref, atol=1e-5, rtol=1e-5), (out, ref)

    print("KERNEL_OK")
</pallas_src>

<mosaic_0001>
module attributes {stable_mosaic.version = 11 : i64} {
  func.func @_dice_kernel(%arg0: i32, %arg1: i32, %arg2: memref<8x256xf32, #tpu.memory_space<vmem>>, %arg3: memref<8x256xf32, #tpu.memory_space<vmem>>, %arg4: memref<8x128xf32, #tpu.memory_space<vmem>>, %arg5: memref<8x1xf32, #tpu.memory_space<vmem>>, %arg6: memref<8x1xf32, #tpu.memory_space<vmem>>) attributes {dimension_semantics = [#tpu.dimension_semantics<parallel>, #tpu.dimension_semantics<arbitrary>], iteration_bounds = array<i64: 1, 1>, scalar_prefetch = 0 : i64, scratch_operands = 2 : i64, tpu.core_type = #tpu.core_type<tc>, window_params = [{transform_indices = @transform_0, window_bounds = array<i64: 8, 256>}, {transform_indices = @transform_1, window_bounds = array<i64: 8, 256>}, {transform_indices = @transform_2, window_bounds = array<i64: 8, 128>}]} {
    %c0_i32 = arith.constant 0 : i32
    %0 = arith.cmpi eq, %arg1, %c0_i32 : i32
    %1 = arith.extui %0 : i1 to i32
    %c0_i32_0 = arith.constant 0 : i32
    %2 = arith.cmpi ne, %1, %c0_i32_0 : i32
    scf.if %2 {
      %cst_16 = arith.constant 0.000000e+00 : f32
      %25 = vector.broadcast %cst_16 : f32 to vector<8x1xf32>
      %c0_17 = arith.constant 0 : index
      %c0_18 = arith.constant 0 : index
      %26 = vector.load %arg5[%c0_17, %c0_18] : memref<8x1xf32, #tpu.memory_space<vmem>>, vector<8x1xf32>
      tpu.vector_store %arg5[%c0_17, %c0_18], %25 {strides = array<i32>} : memref<8x1xf32, #tpu.memory_space<vmem>>, vector<8x1xf32>,
      %cst_19 = arith.constant 0.000000e+00 : f32
      %27 = vector.broadcast %cst_19 : f32 to vector<8x1xf32>
      %c0_20 = arith.constant 0 : index
      %c0_21 = arith.constant 0 : index
      %28 = vector.load %arg6[%c0_20, %c0_21] : memref<8x1xf32, #tpu.memory_space<vmem>>, vector<8x1xf32>
      tpu.vector_store %arg6[%c0_20, %c0_21], %27 {strides = array<i32>} : memref<8x1xf32, #tpu.memory_space<vmem>>, vector<8x1xf32>,
    } else {
    }
    %c0 = arith.constant 0 : index
    %c0_1 = arith.constant 0 : index
    %3 = vector.load %arg2[%c0, %c0_1] : memref<8x256xf32, #tpu.memory_space<vmem>>, vector<8x256xf32>
    %c0_2 = arith.constant 0 : index
    %c0_3 = arith.constant 0 : index
    %4 = vector.load %arg3[%c0_2, %c0_3] : memref<8x256xf32, #tpu.memory_space<vmem>>, vector<8x256xf32>
    %5 = arith.negf %3 : vector<8x256xf32>
    %6 = math.exp %5 : vector<8x256xf32>
    %cst = arith.constant 1.000000e+00 : f32
    %7 = vector.broadcast %cst : f32 to vector<8x256xf32>
    %8 = arith.addf %7, %6 : vector<8x256xf32>
    %9 = arith.divf %7, %8 : vector<8x256xf32>
    %c0_4 = arith.constant 0 : index
    %c0_5 = arith.constant 0 : index
    %10 = vector.load %arg5[%c0_4, %c0_5] : memref<8x1xf32, #tpu.memory_space<vmem>>, vector<8x1xf32>
    %11 = arith.mulf %9, %4 : vector<8x256xf32>
    %cst_6 = arith.constant dense<0.000000e+00> : vector<8xf32>
    %12 = vector.multi_reduction <add>, %11, %cst_6 [1] : vector<8x256xf32> to vector<8xf32>
    %13 = vector.shape_cast %12 : vector<8xf32> to vector<8x1xf32>
    %14 = arith.addf %10, %13 : vector<8x1xf32>
    %c0_7 = arith.constant 0 : index
    %c0_8 = arith.constant 0 : index
    %15 = vector.load %arg5[%c0_7, %c0_8] : memref<8x1xf32, #tpu.memory_space<vmem>>, vector<8x1xf32>
    tpu.vector_store %arg5[%c0_7, %c0_8], %14 {strides = array<i32>} : memref<8x1xf32, #tpu.memory_space<vmem>>, vector<8x1xf32>,
    %c0_9 = arith.constant 0 : index
    %c0_10 = arith.constant 0 : index
    %16 = vector.load %arg6[%c0_9, %c0_10] : memref<8x1xf32, #tpu.memory_space<vmem>>, vector<8x1xf32>
    %17 = arith.addf %9, %4 : vector<8x256xf32>
    %cst_11 = arith.constant dense<0.000000e+00> : vector<8xf32>
    %18 = vector.multi_reduction <add>, %17, %cst_11 [1] : vector<8x256xf32> to vector<8xf32>
    %19 = vector.shape_cast %18 : vector<8xf32> to vector<8x1xf32>
    %20 = arith.addf %16, %19 : vector<8x1xf32>
    %c0_12 = arith.constant 0 : index
    %c0_13 = arith.constant 0 : index
    %21 = vector.load %arg6[%c0_12, %c0_13] : memref<8x1xf32, #tpu.memory_space<vmem>>, vector<8x1xf32>
    tpu.vector_store %arg6[%c0_12, %c0_13], %20 {strides = array<i32>} : memref<8x1xf32, #tpu.memory_space<vmem>>, vector<8x1xf32>,
    %c0_i32_14 = arith.constant 0 : i32
    %22 = arith.cmpi eq, %arg1, %c0_i32_14 : i32
    %23 = arith.extui %22 : i1 to i32
    %c0_i32_15 = arith.constant 0 : i32
    %24 = arith.cmpi ne, %23, %c0_i32_15 : i32
    scf.if %24 {
      %c0_16 = arith.constant 0 : index
      %c0_17 = arith.constant 0 : index
      %25 = vector.load %arg5[%c0_16, %c0_17] : memref<8x1xf32, #tpu.memory_space<vmem>>, vector<8x1xf32>
      %cst_18 = arith.constant 2.000000e+00 : f32
      %26 = vector.broadcast %cst_18 : f32 to vector<8x1xf32>
      %27 = arith.mulf %26, %25 : vector<8x1xf32>
      %cst_19 = arith.constant 1.000000e+00 : f32
      %28 = vector.broadcast %cst_19 : f32 to vector<8x1xf32>
      %29 = arith.addf %27, %28 : vector<8x1xf32>
      %c0_20 = arith.constant 0 : index
      %c0_21 = arith.constant 0 : index
      %30 = vector.load %arg6[%c0_20, %c0_21] : memref<8x1xf32, #tpu.memory_space<vmem>>, vector<8x1xf32>
      %cst_22 = arith.constant 1.000000e+00 : f32
      %31 = vector.broadcast %cst_22 : f32 to vector<8x1xf32>
      %32 = arith.addf %30, %31 : vector<8x1xf32>
      %33 = arith.divf %29, %32 : vector<8x1xf32>
      %cst_23 = arith.constant 1.000000e+00 : f32
      %34 = vector.broadcast %cst_23 : f32 to vector<8x1xf32>
      %35 = arith.subf %34, %33 : vector<8x1xf32>
      %36 = vector.shape_cast %35 : vector<8x1xf32> to vector<8x1xf32>
      %37 = vector.broadcast %36 : vector<8x1xf32> to vector<8x128xf32>
      %c0_24 = arith.constant 0 : index
      %c0_25 = arith.constant 0 : index
      %38 = vector.load %arg4[%c0_24, %c0_25] : memref<8x128xf32, #tpu.memory_space<vmem>>, vector<8x128xf32>
      tpu.vector_store %arg4[%c0_24, %c0_25], %37 {strides = array<i32>} : memref<8x128xf32, #tpu.memory_space<vmem>>, vector<8x128xf32>,
    } else {
    }
    return
  }
  func.func @transform_0(%arg0: i32, %arg1: i32) -> (i32, i32) {
    %c0_i32 = arith.constant 0 : i32
    return %arg0, %arg1 : i32, i32
  }
  func.func @transform_1(%arg0: i32, %arg1: i32) -> (i32, i32) {
    %c0_i32 = arith.constant 0 : i32
    return %arg0, %arg1 : i32, i32
  }
  func.func @transform_2(%arg0: i32, %arg1: i32) -> (i32, i32) {
    %c0_i32 = arith.constant 0 : i32
    %c0_i32_0 = arith.constant 0 : i32
    return %arg0, %c0_i32 : i32, i32
  }
}

</mosaic_0001>

<llo_original>
// kernel: tpu_custom_call.1
$region0: #{tpu_custom_call.1}
  #allocation0 [shape = 'u32[]', space=smem, size = 0x4, offset = 0x4, fixed_abs, tag = 'smem constant byte address 0x4 - core index']
  #allocation1 [shape = 'u32[144,128]{1,0:T(1,128)}', space=vmem, size = 0x12000, scoped, tag = 'internal scratch']
  #allocation2 [shape = 'f32[8,1]{1,0:T(8,128)}', space=vmem, size = 0x1000, scoped, tag = 'scratch operand']
  #allocation3 [shape = 'f32[8,1]{1,0:T(8,128)}', space=vmem, size = 0x1000, scoped, tag = 'scratch operand']
  %s0 = inlined_call_operand.hbm [shape: f32[8,256], index: 0, kind: input, shape index: {}]
  %s1 = inlined_call_operand.hbm [shape: f32[8,256], index: 1, kind: input, shape index: {}]
  %s2 = inlined_call_operand.hbm [shape: f32[8,128], index: 2, kind: output, shape index: {}]
  %s3 = sld [smem:[#allocation0]]
  $region34: #{tpu_custom_call.1} parent=0
    _
  %s5 = ssub.s32 1, %s3
  %s6 = scalar_select 0, %s5, %s3
  $region1: #{tpu_custom_call.1} parent=0
    #allocation4 [shape = 'u8[8192]{0}', space=vmem, size = 0x2000, scoped, tag = 'input window, operand 0, single buffered']
    #allocation5 [shape = 's32[1]{0}', space=sflag, size = 0x4, scoped, tag = 'scoped memory for tpu_custom_call.1']
    #allocation6 [shape = 's32[1]{0}', space=sflag, size = 0x4, scoped, tag = 'scoped memory for tpu_custom_call.1']
    #allocation7 [shape = 'u8[8192]{0}', space=vmem, size = 0x2000, scoped, tag = 'input window, operand 1, single buffered']
    #allocation8 [shape = 's32[1]{0}', space=sflag, size = 0x4, scoped, tag = 'scoped memory for tpu_custom_call.1']
    #allocation9 [shape = 'u8[4096]{0}', space=vmem, size = 0x1000, scoped, tag = 'output window, operand 0, single buffered']
    %7 = vsyncpa [#allocation5], 0
    %8 = vsyncpa [#allocation8], 0
    %9 = vsyncpa [#allocation6], 0
    // Predicated region
    $region2: #{tpu_custom_call.1} parent=1 // pred_check
      _
    $region3: #{tpu_custom_call.1} parent=1 // pred_check_branch
      %11 = sbr.rel (0) target = $region5
    $region4: #{tpu_custom_call.1} parent=1 // pred_region
      %s13 = ssub.s32 256, 256
      %14 = vsyncadd [#allocation5], %s13
      %s16 = sshll.u32 [#allocation4], 4
      %s17 = int_to_ptr.vmem [resolvable:$true] %s16
      %19 = dma.hbm_to_vmem [thread:$0]  %s0, 256, %s17, [#allocation5]
    $region5: #{tpu_custom_call.1} parent=1 // pred_fallthru
      _
    // Predicated region
    $region6: #{tpu_custom_call.1} parent=1 // pred_check
      _
    $region7: #{tpu_custom_call.1} parent=1 // pred_check_branch
      %21 = sbr.rel (0) target = $region9
    $region8: #{tpu_custom_call.1} parent=1 // pred_region
      %s23 = ssub.s32 256, 256
      %24 = vsyncadd [#allocation8], %s23
      %s26 = sshll.u32 [#allocation7], 4
      %s27 = int_to_ptr.vmem [resolvable:$true] %s26
      %29 = dma.hbm_to_vmem [thread:$0]  %s1, 256, %s27, [#allocation8]
    $region9: #{tpu_custom_call.1} parent=1 // pred_fallthru
      _
    // Predicated region
    $region10: #{tpu_custom_call.1} parent=1 // pred_check
      _
    $region11: #{tpu_custom_call.1} parent=1 // pred_check_branch
      %31 = sbr.rel (0) target = $region13
    $region12: #{tpu_custom_call.1} parent=1 // pred_region
      %32 = dma.done [#allocation5], 256
    $region13: #{tpu_custom_call.1} parent=1 // pred_fallthru
      _
    // Predicated region
    $region14: #{tpu_custom_call.1} parent=1 // pred_check
      _
    $region15: #{tpu_custom_call.1} parent=1 // pred_check_branch
      %34 = sbr.rel (0) target = $region17
    $region16: #{tpu_custom_call.1} parent=1 // pred_region
      %35 = dma.done [#allocation8], 256
    $region17: #{tpu_custom_call.1} parent=1 // pred_fallthru
      _
    %p36 = scmp.eq.s32.totalorder 0, 0
    // Predicated region
    $region18: #{tpu_custom_call.1} parent=1 // pred_check
      %p37 = pneg %p36
    $region19: #{tpu_custom_call.1} parent=1 // pred_check_branch
      %39 = sbr.rel (%p37) target = $region21
    $region20: #{tpu_custom_call.1} parent=1 // pred_region
      %vm40 = vcmask 7168
      %41 = vst.msk [vmem:[#allocation2] sm:$0xff] %vm40, 0.0
      %42 = vst.msk [vmem:[#allocation3] sm:$0xff] %vm40, 0.0
    $region21: #{tpu_custom_call.1} parent=1 // pred_fallthru
      _
    %v43 = vld [vmem:[#allocation4] sm:$0xff]
    %v44 = vld [vmem:[#allocation4 + $0x8] sm:$0xff]
    %v45 = vld [vmem:[#allocation7] sm:$0xff]
    %v46 = vld [vmem:[#allocation7 + $0x8] sm:$0xff]
    %v47 = vxor.u32 %v43, 2147483648
    %v48 = vxor.u32 %v44, 2147483648
    %v49 = vmul.f32 %v47, 1.442695
    %v50 = vpow.pop %v49
    %v51 = vmul.f32 %v48, 1.442695
    %v52 = vpow.pop %v51
    %v53 = vadd.f32 %v50, 1.0
    %v54 = vadd.f32 %v52, 1.0
    %v55 = vrcp.pop %v53
    %v56 = vmul.f32 1.0, %v55
    %v57 = vrcp.pop %v54
    %v58 = vmul.f32 1.0, %v57
    %v59 = vld [vmem:[#allocation2] sm:$0xff]
    %v60 = vmul.f32 %v56, %v45
    %v61 = vmul.f32 %v58, %v46
    %v62 = vadd.f32 %v60, %v61
    %63 = vadd.xlane.f32.xlu0 %v62
    %v64 = vpop.xlane.xlu0 %63
    %v65 = vadd.f32 %v59, %v64
    %vm66 = vcmask 7168
    %67 = vst.msk [vmem:[#allocation2] sm:$0xff] %vm66, %v65
    %v68 = vld [vmem:[#allocation3] sm:$0xff]
    %v69 = vadd.f32 %v56, %v45
    %v70 = vadd.f32 %v58, %v46
    %v71 = vadd.f32 %v69, %v70
    %72 = vadd.xlane.f32.xlu0 %v71
    %v73 = vpop.xlane.xlu0 %72
    %v74 = vadd.f32 %v68, %v73
    %75 = vst.msk [vmem:[#allocation3] sm:$0xff] %vm66, %v74
    // Predicated region
    $region22: #{tpu_custom_call.1} parent=1 // pred_check
      %p76 = pneg %p36
    $region23: #{tpu_custom_call.1} parent=1 // pred_check_branch
      %78 = sbr.rel (%p76) target = $region25
    $region24: #{tpu_custom_call.1} parent=1 // pred_region
      %v79 = vld [vmem:[#allocation2] sm:$0xff]
      %v80 = vmul.f32 %v79, 2.0
      %v81 = vadd.f32 %v80, 1.0
      %v82 = vld [vmem:[#allocation3] sm:$0xff]
      %v83 = vadd.f32 %v82, 1.0
      %v84 = vrcp.pop %v83
      %v85 = vmul.f32 %v81, %v84
      %v86 = vsub.f32 1.0, %v85
      %88 = vset.pattern.permute.xlu0 0
      %89 = vperm.xlu0 %88, %v86
      %v90 = vpop.permute.xlu0 %89
      %92 = vst [vmem:[#allocation9] sm:$0xff] %v90
    $region25: #{tpu_custom_call.1} parent=1 // pred_fallthru
      _
    // Predicated region
    $region26: #{tpu_custom_call.1} parent=1 // pred_check
      _
    $region27: #{tpu_custom_call.1} parent=1 // pred_check_branch
      %94 = sbr.rel (0) target = $region29
    $region28: #{tpu_custom_call.1} parent=1 // pred_region
      %s96 = ssub.s32 128, 128
      %97 = vsyncadd [#allocation6], %s96
      %s99 = sshll.u32 [#allocation9], 4
      %s100 = int_to_ptr.vmem [resolvable:$true] %s99
      %102 = dma.vmem_to_hbm [thread:$0]  %s100, 128, %s2, [#allocation6]
    $region29: #{tpu_custom_call.1} parent=1 // pred_fallthru
      _
    // Predicated region
    $region30: #{tpu_custom_call.1} parent=1 // pred_check
      _
    $region31: #{tpu_custom_call.1} parent=1 // pred_check_branch
      %104 = sbr.rel (0) target = $region33
    $region32: #{tpu_custom_call.1} parent=1 // pred_region
      %105 = dma.done [#allocation6], 128
    $region33: #{tpu_custom_call.1} parent=1 // pred_fallthru
      _
    %106 = vsyncpa [#allocation5], 1
    %107 = vsyncpa [#allocation8], 1
    %108 = vsyncpa [#allocation6], 1

</llo_original>
